<compile_context>
chip_gen: v7x
topology: tpu7x:2x2x1
jax: 0.10.0
libtpu: 0.0.40
codegen_flags: <defaults>
</compile_context>

<pallas_src>
import functools
import math

import jax
import jax.numpy as jnp
from jax.experimental import pallas as pl
from jax.experimental.pallas import tpu as pltpu


# ---------------------------------------------------------------------------
# kernels
# ---------------------------------------------------------------------------

def _row_losses(logit_ref, label_ref, weight_ref):
    """Per-row soft cross-entropy losses for one (tb, K) tile -> (tb, 1) f32."""
    x = logit_ref[...].astype(jnp.float32)
    y = label_ref[...].astype(jnp.float32)
    if weight_ref is not None:
        y = y * weight_ref[...].astype(jnp.float32)        # weight fused in-kernel
    m = jnp.max(x, axis=-1, keepdims=True)                 # max_logit
    z = x - m                                              # logit - max
    s = jnp.sum(jnp.exp(z), axis=-1, keepdims=True)        # exp_sum
    # sum((log(s) - z) * y, -1) == log(s)*sum(y,-1) - sum(z*y,-1)   (exact)
    return (jnp.log(s) * jnp.sum(y, axis=-1, keepdims=True)
            - jnp.sum(z * y, axis=-1, keepdims=True))


def _soft_ce_sum_kernel(*refs, total_rows, has_weight):
    """Fused-reduction path: accumulate sum of per-row losses into a (1,1) acc."""
    if has_weight:
        logit_ref, label_ref, weight_ref, out_ref = refs
    else:
        logit_ref, label_ref, out_ref = refs
        weight_ref = None
    tb = logit_ref.shape[0]

    loss = _row_losses(logit_ref, label_ref, weight_ref)            # (tb, 1)
    # Mask ragged tail rows of the last (partial) grid step: those rows of the
    # VMEM block hold unspecified data and must not contribute to the sum.
    row = pl.program_id(0) * tb + jax.lax.broadcasted_iota(jnp.int32, (tb, 1), 0)
    loss = jnp.where(row < total_rows, loss, 0.0)

    @pl.when(pl.program_id(0) == 0)
    def _():
        out_ref[...] = jnp.zeros_like(out_ref)

    out_ref[...] += jnp.sum(loss, axis=0, keepdims=True)            # (1, 1)


def _soft_ce_row_kernel(*refs, has_weight):
    """reduction='none' path: per-row losses, (tb, 1) block per grid step."""
    if has_weight:
        logit_ref, label_ref, weight_ref, out_ref = refs
    else:
        logit_ref, label_ref, out_ref = refs
        weight_ref = None
    out_ref[...] = _row_losses(logit_ref, label_ref, weight_ref).astype(out_ref.dtype)


# ---------------------------------------------------------------------------
# wrapper
# ---------------------------------------------------------------------------

def _pick_tile(B, row_bytes, block_rows):
    """Choose the row tile from the per-generation VMEM budget."""
    try:
        vmem_cap = int(pltpu.get_tpu_info().vmem_capacity_bytes)
    except Exception:
        vmem_cap = 64 * 1024 * 1024            # conservative default (v7x per-TC)
    vmem_limit = int(min(vmem_cap * 3 // 4, 96 * 1024 * 1024))
    if block_rows is None:
        # 2 pipeline buffers per input stream; keep them under ~half the limit.
        tb = (vmem_limit // 2) // max(1, 2 * row_bytes)
        tb = min(tb, 1024)
    else:
        tb = int(block_rows)
    tb = max(tb, 8)
    if tb >= B:
        tb = B                                  # single full-extent block
    else:
        tb = max(8, (tb // 8) * 8)              # sublane alignment
    return tb, vmem_limit


def soft_cross_entropy_pallas(logit, label, weight=None, reduce=None,
                              reduction='mean', *, block_rows=None):
    """Pallas equivalent of scood.losses.soft_cross_entropy (forward only)."""
    assert logit.shape == label.shape, 'logit.shape != label.shape'
    if weight is not None and weight.shape != logit.shape:
        raise ValueError(
            'since logit.shape = {}, weight.shape should be {}, but got {}'.format(
                logit.shape, logit.shape, weight.shape))

    # same reduction dispatch as the torch helper
    reduction = {True: 'mean', False: 'none', None: reduction}[reduce]
    if reduction not in ('mean', 'sum', 'none'):
        raise ValueError('invalid value for reduction: {}'.format(reduction))

    orig_shape = logit.shape
    K = orig_shape[-1]
    B = int(math.prod(orig_shape[:-1]))

    inputs = [jnp.reshape(logit, (B, K)), jnp.reshape(label, (B, K))]
    has_weight = weight is not None
    if has_weight:
        inputs.append(jnp.reshape(weight, (B, K)))

    row_bytes = K * sum(jnp.dtype(a.dtype).itemsize for a in inputs)
    tb, vmem_limit = _pick_tile(B, row_bytes, block_rows)
    grid = (pl.cdiv(B, tb),)                   # no wrapper-side padding / concat
    in_specs = [pl.BlockSpec((tb, K), lambda i: (i, 0)) for _ in inputs]

    if reduction in ('mean', 'sum'):
        # Fused in-kernel reduction: (1,1) VMEM accumulator, written back once.
        # TODO(synk): a two-stage parallel variant would let v7x use both TCs.
        out = pl.pallas_call(
            functools.partial(_soft_ce_sum_kernel, total_rows=B,
                              has_weight=has_weight),
            out_shape=jax.ShapeDtypeStruct((1, 1), jnp.float32),
            grid_spec=pltpu.PrefetchScalarGridSpec(
                num_scalar_prefetch=0,
                grid=grid,
                in_specs=in_specs,
                out_specs=pl.BlockSpec((1, 1), lambda i: (0, 0)),
            ),
            compiler_params=pltpu.CompilerParams(
                dimension_semantics=("arbitrary",),
                vmem_limit_bytes=vmem_limit),
        )(*inputs)
        total = out[0, 0]
        return total / B if reduction == 'mean' else total

    # reduction == 'none': per-row losses.
    losses = pl.pallas_call(
        functools.partial(_soft_ce_row_kernel, has_weight=has_weight),
        out_shape=jax.ShapeDtypeStruct((B, 1), jnp.float32),
        grid_spec=pltpu.PrefetchScalarGridSpec(
            num_scalar_prefetch=0,
            grid=grid,
            in_specs=in_specs,
            out_specs=pl.BlockSpec((tb, 1), lambda i: (i, 0)),
        ),
        compiler_params=pltpu.CompilerParams(
            dimension_semantics=("parallel",),
            vmem_limit_bytes=vmem_limit),
    )(*inputs)
    return jnp.reshape(losses[:, 0], orig_shape[:-1])


class SoftCrossEntropyLoss:
    """Forward-only JAX/Pallas port of scood.losses.SoftCrossEntropyLoss."""

    def __init__(self, weight=None, reduce=None, reduction='mean'):
        self.weight = weight
        self.reduce = reduce
        self.reduction = reduction

    def __call__(self, logit, label, weight=None):
        if weight is None:
            weight = self.weight
        return soft_cross_entropy_pallas(logit, label, weight,
                                         self.reduce, self.reduction)


# ---------------------------------------------------------------------------
# reference + demo
# ---------------------------------------------------------------------------

def _reference_losses(logit, label):
    # pure-JAX per-row losses mirroring the torch forward
    m = jnp.max(logit, axis=-1, keepdims=True)
    z = logit - m
    s = jnp.sum(jnp.exp(z), axis=-1, keepdims=True)
    return jnp.sum((jnp.log(s) - z) * label, axis=-1)


if __name__ == "__main__":
    key = jax.random.PRNGKey(0)
    k1, k2, k3 = jax.random.split(key, 3)

    # small shapes: B not a multiple of 8, K not a multiple of 128
    B, K = 20, 96
    logits = jax.random.normal(k1, (B, K), dtype=jnp.float32)
    labels = jax.nn.softmax(jax.random.normal(k2, (B, K), dtype=jnp.float32), axis=-1)
    weight = jax.random.uniform(k3, (B, K), dtype=jnp.float32)

    ref_rows = _reference_losses(logits, labels)

    # default module path: reduction='mean', no weight (fused-sum kernel, auto tile)
    loss_fn = SoftCrossEntropyLoss()
    out_mean = jax.block_until_ready(loss_fn(logits, labels))
    assert jnp.allclose(out_mean, jnp.mean(ref_rows), rtol=1e-5, atol=1e-5), (
        out_mean, jnp.mean(ref_rows))

    # 'sum' with forced small tiles -> exercises ragged-tail masking + accumulation
    out_sum = jax.block_until_ready(
        soft_cross_entropy_pallas(logits, labels, reduction='sum', block_rows=8))
    assert jnp.allclose(out_sum, jnp.sum(ref_rows), rtol=1e-5, atol=1e-5), (
        out_sum, jnp.sum(ref_rows))

    # weighted, reduction='none' -> per-row kernel with the weight multiply fused
    out_none = jax.block_until_ready(
        soft_cross_entropy_pallas(logits, labels, weight,
                                  reduction='none', block_rows=8))
    ref_w = _reference_losses(logits, labels * weight)
    assert jnp.allclose(out_none, ref_w, rtol=1e-5, atol=1e-5), (out_none, ref_w)

    print("KERNEL_OK")
</pallas_src>

<mosaic_0001>
module attributes {stable_mosaic.version = 11 : i64} {
  func.func @_soft_ce_sum_kernel(%arg0: i32, %arg1: memref<20x96xf32, #tpu.memory_space<vmem>>, %arg2: memref<20x96xf32, #tpu.memory_space<vmem>>, %arg3: memref<1x1xf32, #tpu.memory_space<vmem>>) attributes {dimension_semantics = [#tpu.dimension_semantics<arbitrary>], iteration_bounds = array<i64: 1>, scalar_prefetch = 0 : i64, scratch_operands = 0 : i64, tpu.core_type = #tpu.core_type<tc>, window_params = [{transform_indices = @transform_0, window_bounds = array<i64: 20, 96>}, {transform_indices = @transform_1, window_bounds = array<i64: 20, 96>}, {pipeline_mode = #tpu.pipeline_mode<synchronous>, transform_indices = @transform_2, window_bounds = array<i64: 1, 1>}]} {
    %c0 = arith.constant 0 : index
    %c0_0 = arith.constant 0 : index
    %0 = vector.load %arg1[%c0, %c0_0] : memref<20x96xf32, #tpu.memory_space<vmem>>, vector<20x96xf32>
    %c0_1 = arith.constant 0 : index
    %c0_2 = arith.constant 0 : index
    %1 = vector.load %arg2[%c0_1, %c0_2] : memref<20x96xf32, #tpu.memory_space<vmem>>, vector<20x96xf32>
    %cst = arith.constant dense<0xFF800000> : vector<20xf32>
    %2 = vector.multi_reduction <maximumf>, %0, %cst [1] : vector<20x96xf32> to vector<20xf32>
    %3 = vector.shape_cast %2 : vector<20xf32> to vector<20x1xf32>
    %4 = vector.broadcast %3 : vector<20x1xf32> to vector<20x96xf32>
    %5 = arith.subf %0, %4 : vector<20x96xf32>
    %6 = math.exp %5 : vector<20x96xf32>
    %cst_3 = arith.constant dense<0.000000e+00> : vector<20xf32>
    %7 = vector.multi_reduction <add>, %6, %cst_3 [1] : vector<20x96xf32> to vector<20xf32>
    %8 = vector.shape_cast %7 : vector<20xf32> to vector<20x1xf32>
    %9 = math.log %8 : vector<20x1xf32>
    %cst_4 = arith.constant dense<0.000000e+00> : vector<20xf32>
    %10 = vector.multi_reduction <add>, %1, %cst_4 [1] : vector<20x96xf32> to vector<20xf32>
    %11 = vector.shape_cast %10 : vector<20xf32> to vector<20x1xf32>
    %12 = arith.mulf %9, %11 : vector<20x1xf32>
    %13 = arith.mulf %5, %1 : vector<20x96xf32>
    %cst_5 = arith.constant dense<0.000000e+00> : vector<20xf32>
    %14 = vector.multi_reduction <add>, %13, %cst_5 [1] : vector<20x96xf32> to vector<20xf32>
    %15 = vector.shape_cast %14 : vector<20xf32> to vector<20x1xf32>
    %16 = arith.subf %12, %15 : vector<20x1xf32>
    %c20_i32 = arith.constant 20 : i32
    %17 = arith.muli %arg0, %c20_i32 : i32
    %18 = tpu.iota {dimensions = array<i32: 0>} : vector<20x1xi32>
    %19 = vector.broadcast %17 : i32 to vector<20x1xi32>
    %20 = arith.addi %19, %18 : vector<20x1xi32>
    %c20_i32_6 = arith.constant 20 : i32
    %21 = vector.broadcast %c20_i32_6 : i32 to vector<20x1xi32>
    %22 = arith.cmpi slt, %20, %21 : vector<20x1xi32>
    %cst_7 = arith.constant 0.000000e+00 : f32
    %23 = vector.broadcast %cst_7 : f32 to vector<20x1xf32>
    %24 = arith.select %22, %16, %23 : vector<20x1xi1>, vector<20x1xf32>
    %c0_i32 = arith.constant 0 : i32
    %25 = arith.cmpi eq, %arg0, %c0_i32 : i32
    %26 = arith.extui %25 : i1 to i32
    %c0_i32_8 = arith.constant 0 : i32
    %27 = arith.cmpi ne, %26, %c0_i32_8 : i32
    scf.if %27 {
      %cst_14 = arith.constant 0.000000e+00 : f32
      %33 = vector.broadcast %cst_14 : f32 to vector<1x1xf32>
      %c0_15 = arith.constant 0 : index
      %c0_16 = arith.constant 0 : index
      %34 = vector.load %arg3[%c0_15, %c0_16] : memref<1x1xf32, #tpu.memory_space<vmem>>, vector<1x1xf32>
      tpu.vector_store %arg3[%c0_15, %c0_16], %33 {strides = array<i32>} : memref<1x1xf32, #tpu.memory_space<vmem>>, vector<1x1xf32>,
    } else {
    }
    %c0_9 = arith.constant 0 : index
    %c0_10 = arith.constant 0 : index
    %28 = vector.load %arg3[%c0_9, %c0_10] : memref<1x1xf32, #tpu.memory_space<vmem>>, vector<1x1xf32>
    %cst_11 = arith.constant dense<0.000000e+00> : vector<1xf32>
    %29 = vector.multi_reduction <add>, %24, %cst_11 [0] : vector<20x1xf32> to vector<1xf32>
    %30 = vector.shape_cast %29 : vector<1xf32> to vector<1x1xf32>
    %31 = arith.addf %28, %30 : vector<1x1xf32>
    %c0_12 = arith.constant 0 : index
    %c0_13 = arith.constant 0 : index
    %32 = vector.load %arg3[%c0_12, %c0_13] : memref<1x1xf32, #tpu.memory_space<vmem>>, vector<1x1xf32>
    tpu.vector_store %arg3[%c0_12, %c0_13], %31 {strides = array<i32>} : memref<1x1xf32, #tpu.memory_space<vmem>>, vector<1x1xf32>,
    return
  }
  func.func @transform_0(%arg0: i32) -> (i32, i32) {
    %c0_i32 = arith.constant 0 : i32
    %c0_i32_0 = arith.constant 0 : i32
    return %arg0, %c0_i32 : i32, i32
  }
  func.func @transform_1(%arg0: i32) -> (i32, i32) {
    %c0_i32 = arith.constant 0 : i32
    %c0_i32_0 = arith.constant 0 : i32
    return %arg0, %c0_i32 : i32, i32
  }
  func.func @transform_2(%arg0: i32) -> (i32, i32) {
    %c0_i32 = arith.constant 0 : i32
    %c0_i32_0 = arith.constant 0 : i32
    %c0_i32_1 = arith.constant 0 : i32
    return %c0_i32, %c0_i32_0 : i32, i32
  }
}

</mosaic_0001>

<llo_original>
// kernel: tpu_custom_call.1
$region0: #{tpu_custom_call.1}
  #allocation0 [shape = 'u32[]', space=smem, size = 0x4, offset = 0x4, fixed_abs, tag = 'smem constant byte address 0x4 - core index']
  #allocation1 [shape = 'u32[144,128]{1,0:T(1,128)}', space=vmem, size = 0x12000, scoped, tag = 'internal scratch']
  %s0 = inlined_call_operand.hbm [shape: f32[20,96], index: 0, kind: input, shape index: {}]
  %s1 = inlined_call_operand.hbm [shape: f32[20,96], index: 1, kind: input, shape index: {}]
  %s2 = inlined_call_operand.hbm [shape: f32[1,1], index: 2, kind: output, shape index: {}]
  %s3 = sld [smem:[#allocation0]]
  $region30: #{tpu_custom_call.1} parent=0
    _
  %s5 = ssub.s32 1, %s3
  %s6 = scalar_select 0, %s5, %s3
  $region1: #{tpu_custom_call.1} parent=0
    #allocation2 [shape = 'u8[12288]{0}', space=vmem, size = 0x3000, scoped, tag = 'input window, operand 0, single buffered']
    #allocation3 [shape = 's32[1]{0}', space=sflag, size = 0x4, scoped, tag = 'scoped memory for tpu_custom_call.1']
    #allocation4 [shape = 's32[1]{0}', space=sflag, size = 0x4, scoped, tag = 'scoped memory for tpu_custom_call.1']
    #allocation5 [shape = 'u8[12288]{0}', space=vmem, size = 0x3000, scoped, tag = 'input window, operand 1, single buffered']
    #allocation6 [shape = 's32[1]{0}', space=sflag, size = 0x4, scoped, tag = 'scoped memory for tpu_custom_call.1']
    #allocation7 [shape = 'u8[512]{0}', space=vmem, size = 0x400, scoped, tag = 'output window, operand 0, single buffered']
    %7 = vsyncpa [#allocation3], 0
    %8 = vsyncpa [#allocation6], 0
    %9 = vsyncpa [#allocation4], 0
    // Predicated region
    $region2: #{tpu_custom_call.1} parent=1 // pred_check
      _
    $region3: #{tpu_custom_call.1} parent=1 // pred_check_branch
      %11 = sbr.rel (0) target = $region5
    $region4: #{tpu_custom_call.1} parent=1 // pred_region
      %s13 = ssub.s32 384, 384
      %14 = vsyncadd [#allocation3], %s13
      %s15 = sshll.u32 [#allocation2], 4
      %s16 = int_to_ptr.vmem [resolvable:$true] %s15
      %21 = dma.hbm_to_vmem [thread:$0]  %s0, 384, %s16, [#allocation3], 128, 128, 8
    $region5: #{tpu_custom_call.1} parent=1 // pred_fallthru
      _
    // Predicated region
    $region6: #{tpu_custom_call.1} parent=1 // pred_check
      _
    $region7: #{tpu_custom_call.1} parent=1 // pred_check_branch
      %23 = sbr.rel (0) target = $region9
    $region8: #{tpu_custom_call.1} parent=1 // pred_region
      %s25 = ssub.s32 384, 384
      %26 = vsyncadd [#allocation6], %s25
      %s27 = sshll.u32 [#allocation5], 4
      %s28 = int_to_ptr.vmem [resolvable:$true] %s27
      %33 = dma.hbm_to_vmem [thread:$0]  %s1, 384, %s28, [#allocation6], 128, 128, 8
    $region9: #{tpu_custom_call.1} parent=1 // pred_fallthru
      _
    // Predicated region
    $region10: #{tpu_custom_call.1} parent=1 // pred_check
      _
    $region11: #{tpu_custom_call.1} parent=1 // pred_check_branch
      %35 = sbr.rel (0) target = $region13
    $region12: #{tpu_custom_call.1} parent=1 // pred_region
      %36 = dma.done [#allocation3], 384
    $region13: #{tpu_custom_call.1} parent=1 // pred_fallthru
      _
    // Predicated region
    $region14: #{tpu_custom_call.1} parent=1 // pred_check
      _
    $region15: #{tpu_custom_call.1} parent=1 // pred_check_branch
      %38 = sbr.rel (0) target = $region17
    $region16: #{tpu_custom_call.1} parent=1 // pred_region
      %39 = dma.done [#allocation6], 384
    $region17: #{tpu_custom_call.1} parent=1 // pred_fallthru
      _
    %v40 = vld [vmem:[#allocation2] sm:$0xff]
    %v41 = vld [vmem:[#allocation2 + $0x8] sm:$0xff]
    %v42 = vld [vmem:[#allocation2 + $0x10] sm:$0xf]
    %v43 = vld [vmem:[#allocation5] sm:$0xff]
    %v44 = vld [vmem:[#allocation5 + $0x8] sm:$0xff]
    %v45 = vld [vmem:[#allocation5 + $0x10] sm:$0xf]
    %vm46 = vcmask 785408
    %v47 = vsel %vm46, %v40, -inf
    %48 = vmax.xlane.f32.xlu0 %v47
    %v49 = vpop.xlane.xlu0 %48
    %v50 = vsel %vm46, %v41, -inf
    %51 = vmax.xlane.f32.xlu0 %v50
    %v52 = vpop.xlane.xlu0 %51
    %vm53 = vcmask 781312
    %v54 = vsel %vm53, %v42, -inf
    %55 = vmax.xlane.f32.xlu0 %v54
    %v56 = vpop.xlane.xlu0 %55
    %v57 = vsub.f32 %v40, %v49
    %v58 = vsub.f32 %v41, %v52
    %v59 = vsub.f32 %v42, %v56
    %v60 = vmul.f32 %v57, 1.442695
    %v61 = vpow.pop %v60
    %v62 = vmul.f32 %v58, 1.442695
    %v63 = vpow.pop %v62
    %v64 = vmul.f32 %v59, 1.442695
    %v65 = vpow.pop %v64
    %v66 = vsel %vm46, %v61, 0.0
    %67 = vadd.xlane.f32.xlu0 %v66
    %v68 = vpop.xlane.xlu0 %67
    %v69 = vsel %vm46, %v63, 0.0
    %70 = vadd.xlane.f32.xlu0 %v69
    %v71 = vpop.xlane.xlu0 %70
    %v72 = vsel %vm53, %v65, 0.0
    %73 = vadd.xlane.f32.xlu0 %v72
    %v74 = vpop.xlane.xlu0 %73
    %v75 = vlog2.pop %v68
    %v76 = vmul.f32 %v75, 0.6931472
    %v77 = vlog2.pop %v71
    %v78 = vmul.f32 %v77, 0.6931472
    %v79 = vlog2.pop %v74
    %v80 = vmul.f32 %v79, 0.6931472
    %v81 = vsel %vm46, %v43, 0.0
    %82 = vadd.xlane.f32.xlu0 %v81
    %v83 = vpop.xlane.xlu0 %82
    %v84 = vsel %vm46, %v44, 0.0
    %85 = vadd.xlane.f32.xlu0 %v84
    %v86 = vpop.xlane.xlu0 %85
    %v87 = vsel %vm53, %v45, 0.0
    %88 = vadd.xlane.f32.xlu0 %v87
    %v89 = vpop.xlane.xlu0 %88
    %v90 = vmul.f32 %v76, %v83
    %v91 = vmul.f32 %v78, %v86
    %v92 = vmul.f32 %v80, %v89
    %v93 = vmul.f32 %v57, %v43
    %v94 = vmul.f32 %v58, %v44
    %v95 = vmul.f32 %v59, %v45
    %v96 = vsel %vm46, %v93, 0.0
    %97 = vadd.xlane.f32.xlu0 %v96
    %v98 = vpop.xlane.xlu0 %97
    %v99 = vsel %vm46, %v94, 0.0
    %100 = vadd.xlane.f32.xlu0 %v99
    %v101 = vpop.xlane.xlu0 %100
    %v102 = vsel %vm53, %v95, 0.0
    %103 = vadd.xlane.f32.xlu0 %v102
    %v104 = vpop.xlane.xlu0 %103
    %v105 = vsub.f32 %v90, %v98
    %v106 = vsub.f32 %v91, %v101
    %v107 = vsub.f32 %v92, %v104
    %s108 = smul.u32 0, 20
    %v109 = vlaneseq
    %v110 = vshrl.u32 %v109, 7
    %v111 = vadd.s32 %v110, 8
    %v112 = vadd.s32 %v110, 16
    %v113 = vstv %s108
    %v114 = vadd.s32 %v113, %v110
    %v115 = vadd.s32 %v113, %v111
    %v116 = vadd.s32 %v113, %v112
    %vm117 = vcmp.lt.s32.totalorder %v114, 20
    %vm118 = vcmp.lt.s32.totalorder %v115, 20
    %vm119 = vcmp.lt.s32.totalorder %v116, 20
    %v120 = vsel %vm117, %v105, 0.0
    %v121 = vsel %vm118, %v106, 0.0
    %v122 = vsel %vm119, %v107, 0.0
    %p123 = scmp.eq.s32.totalorder 0, 0
    // Predicated region
    $region18: #{tpu_custom_call.1} parent=1 // pred_check
      %p124 = pneg %p123
    $region19: #{tpu_custom_call.1} parent=1 // pred_check_branch
      %126 = sbr.rel (%p124) target = $region21
    $region20: #{tpu_custom_call.1} parent=1 // pred_region
      %vm127 = vcmask 0
      %128 = vst.msk [vmem:[#allocation7] sm:$0x1] %vm127, 0.0
    $region21: #{tpu_custom_call.1} parent=1 // pred_fallthru
      _
    %v129 = vld [vmem:[#allocation7] sm:$0x1]
    %v130 = vadd.f32 %v120, %v121
    %vm131 = vcmask 1043456
    %v132 = vsel %vm131, %v122, 0.0
    %v133 = vadd.f32 %v130, %v132
    %v134 = vrot.slane %v133, 4
    %v135 = vadd.f32 %v133, %v134
    %v136 = vrot.slane %v135, 2
    %v137 = vadd.f32 %v135, %v136
    %v138 = vrot.slane %v137, 1
    %v139 = vadd.f32 %v137, %v138
    %v140 = vadd.f32 %v129, %v139
    %vm141 = vcmask 0
    %142 = vst.msk [vmem:[#allocation7] sm:$0x1] %vm141, %v140
    // Predicated region
    $region22: #{tpu_custom_call.1} parent=1 // pred_check
      _
    $region23: #{tpu_custom_call.1} parent=1 // pred_check_branch
      %144 = sbr.rel (0) target = $region25
    $region24: #{tpu_custom_call.1} parent=1 // pred_region
      %s146 = ssub.s32 16, 16
      %147 = vsyncadd [#allocation4], %s146
      %s149 = sshll.u32 [#allocation7], 4
      %s150 = int_to_ptr.vmem [resolvable:$true] %s149
      %152 = dma.vmem_to_hbm [thread:$0]  %s150, 16, %s2, [#allocation4]
    $region25: #{tpu_custom_call.1} parent=1 // pred_fallthru
      _
    // Predicated region
    $region26: #{tpu_custom_call.1} parent=1 // pred_check
      _
    $region27: #{tpu_custom_call.1} parent=1 // pred_check_branch
      %154 = sbr.rel (0) target = $region29
    $region28: #{tpu_custom_call.1} parent=1 // pred_region
      %155 = dma.done [#allocation4], 16
    $region29: #{tpu_custom_call.1} parent=1 // pred_fallthru
      _
    %156 = vsyncpa [#allocation3], 1
    %157 = vsyncpa [#allocation6], 1
    %158 = vsyncpa [#allocation4], 1

</llo_original>
